<compile_context>
chip_gen: v6e
topology: v6e:2x2x1
jax: 0.10.0
libtpu: 0.0.40
codegen_flags: <defaults>
</compile_context>

<pallas_src>
from typing import NamedTuple

import jax
import jax.numpy as jnp
from jax.experimental import pallas as pl
from jax.experimental.pallas import tpu as pltpu


def _round_up(x, m):
    return (x + m - 1) // m * m


# ---------------------------------------------------------------------------
# Kernel
# ---------------------------------------------------------------------------
def _macro_agent_kernel(x_ref, w1_ref, w2_ref, w3t_ref, b12_ref, b3_ref, o_ref):
    cdt = w1_ref.dtype
    # In-kernel VPU cast of the streamed x tile (f32 in HBM -> compute dtype).
    x = x_ref[...].astype(cdt)
    b1 = b12_ref[0:1, :]          # (1, H) f32
    b2 = b12_ref[1:2, :]          # (1, H) f32

    # Layer 1: Linear + ReLU (MXU matmul, f32 accumulation).
    h1 = jnp.dot(x, w1_ref[...], preferred_element_type=jnp.float32)
    h1 = jnp.maximum(h1 + b1, 0.0).astype(cdt)
    # Layer 2: Linear + ReLU.
    h2 = jnp.dot(h1, w2_ref[...], preferred_element_type=jnp.float32)
    h2 = jnp.maximum(h2 + b2, 0.0).astype(cdt)
    # Layer 3, transposed: w3t (OUT_SUB, H) x h2 (TB, H), contracting H,
    # -> (OUT_SUB, TB).  Batch lands on lanes -> unmasked lane-dense store.
    out_t = jax.lax.dot_general(
        w3t_ref[...], h2, (((1,), (1,)), ((), ())),
        preferred_element_type=jnp.float32)
    o_ref[...] = (out_t + b3_ref[...]).astype(o_ref.dtype)


# ---------------------------------------------------------------------------
# One-time parameter preparation (hoisted out of the forward path)
# ---------------------------------------------------------------------------
class MacroAgentParams(NamedTuple):
    w1: jax.Array        # (in, H)       compute dtype
    w2: jax.Array        # (H, H)        compute dtype
    w3t: jax.Array       # (OUT_SUB, H)  compute dtype, transposed + sublane-padded
    b12: jax.Array       # (2, H)        f32  (rows: b1, b2)
    b3c: jax.Array       # (OUT_SUB, 1)  f32  column vector
    out_size: int


def prepare_params(w1, b1, w2, b2, w3, b3, *, compute_dtype=jnp.bfloat16):
    """Cast / transpose / pad the parameters once; reuse for every forward call.

    compute_dtype: matmul operand dtype.  bf16 is MXU-native on every TPU
    generation (accumulation stays f32); pass jnp.float32 for full precision.
    """
    hidden = w1.shape[1]
    out_size = w3.shape[1]
    out_sub = _round_up(out_size, 8)

    w1p = jnp.asarray(w1, compute_dtype)
    w2p = jnp.asarray(w2, compute_dtype)
    w3t = jnp.zeros((out_sub, hidden), compute_dtype)
    w3t = w3t.at[:out_size, :].set(jnp.asarray(w3, compute_dtype).T)

    b12 = jnp.stack([jnp.asarray(b1, jnp.float32).reshape(hidden),
                     jnp.asarray(b2, jnp.float32).reshape(hidden)])
    b3c = jnp.zeros((out_sub, 1), jnp.float32)
    b3c = b3c.at[:out_size, 0].set(jnp.asarray(b3, jnp.float32).reshape(out_size))
    return MacroAgentParams(w1p, w2p, w3t, b12, b3c, out_size)


# ---------------------------------------------------------------------------
# Batch tiling
# ---------------------------------------------------------------------------
_MAX_TILE = 2048     # rows/grid step: x tile 256 KiB + h1/h2 temps ~2 MiB << VMEM
_MIN_STEPS = 4       # v7x: 2 TensorCores x >=2 pipelined steps each


def _choose_tiling(batch):
    b8 = _round_up(batch, 8)
    if b8 <= 256:                       # small batch: single step, tile == full dim
        return b8, b8
    # Multi-step: the tile must be a multiple of 128 so the transposed
    # (batch-on-lanes) output block stays unmasked / lane-dense.
    tb = min(_MAX_TILE, max(128, _round_up(pl.cdiv(b8, _MIN_STEPS), 128)))
    # Prefer a tile that divides the batch exactly (skips the x pad copy).
    for cand in range(tb, 0, -128):
        if batch % cand == 0:
            return cand, batch
    return tb, _round_up(batch, tb)


# ---------------------------------------------------------------------------
# Forward
# ---------------------------------------------------------------------------
def macro_agent_forward(x, params: MacroAgentParams):
    """x: (B, input_size) f32 -> (B, output_size) f32."""
    batch, in_size = x.shape
    hidden = params.w1.shape[1]
    out_sub = params.w3t.shape[0]

    tb, b_padded = _choose_tiling(batch)
    if b_padded != batch:               # only for ragged batches; tiny copy
        x = jnp.pad(x, ((0, b_padded - batch), (0, 0)))

    out_t = pl.pallas_call(
        _macro_agent_kernel,
        out_shape=jax.ShapeDtypeStruct((out_sub, b_padded), jnp.float32),
        grid=(b_padded // tb,),
        in_specs=[
            pl.BlockSpec((tb, in_size), lambda i: (i, 0)),       # x tile (streamed)
            pl.BlockSpec((in_size, hidden), lambda i: (0, 0)),   # w1   (VMEM-resident)
            pl.BlockSpec((hidden, hidden), lambda i: (0, 0)),    # w2   (VMEM-resident)
            pl.BlockSpec((out_sub, hidden), lambda i: (0, 0)),   # w3^T (VMEM-resident)
            pl.BlockSpec((2, hidden), lambda i: (0, 0)),         # b1,b2 (VMEM-resident)
            pl.BlockSpec((out_sub, 1), lambda i: (0, 0)),        # b3 col (VMEM-resident)
        ],
        out_specs=pl.BlockSpec((out_sub, tb), lambda i: (0, i)), # batch on lanes
        compiler_params=pltpu.CompilerParams(
            dimension_semantics=("parallel",),
        ),
    )(x, params.w1, params.w2, params.w3t, params.b12, params.b3c)

    # Tiny (OUT_SUB, B) slab -> (B, out_size); negligible XLA transpose/slice.
    return out_t[:params.out_size, :batch].T


# ---------------------------------------------------------------------------
# Demo / correctness check
# ---------------------------------------------------------------------------
def init_params(key, input_size, hidden_size=128, output_size=3):
    """Deterministic init mimicking PyTorch nn.Linear (uniform +/-1/sqrt(fan_in))."""
    ks = jax.random.split(key, 6)

    def linear(kw, kb, fan_in, fan_out):
        bound = 1.0 / jnp.sqrt(jnp.float32(fan_in))
        w = jax.random.uniform(kw, (fan_in, fan_out), jnp.float32, -bound, bound)
        b = jax.random.uniform(kb, (fan_out,), jnp.float32, -bound, bound)
        return w, b

    w1, b1 = linear(ks[0], ks[1], input_size, hidden_size)
    w2, b2 = linear(ks[2], ks[3], hidden_size, hidden_size)
    w3, b3 = linear(ks[4], ks[5], hidden_size, output_size)
    return w1, b1, w2, b2, w3, b3


def _reference(x, w1, b1, w2, b2, w3, b3):
    hp = jax.lax.Precision.HIGHEST
    h = jnp.maximum(jnp.dot(x, w1, precision=hp) + b1, 0.0)
    h = jnp.maximum(jnp.dot(h, w2, precision=hp) + b2, 0.0)
    return jnp.dot(h, w3, precision=hp) + b3


if __name__ == "__main__":
    key = jax.random.PRNGKey(0)
    k_x, k_p = jax.random.split(key)

    input_size, hidden_size, output_size = 32, 128, 3
    raw = init_params(k_p, input_size, hidden_size, output_size)

    params_bf16 = prepare_params(*raw)                              # default bf16
    params_f32 = prepare_params(*raw, compute_dtype=jnp.float32)    # full precision

    # batch=512 -> 4 parallel grid steps of 128 rows (dual-TC eligible on v7x,
    # no x pad); batch=10 -> single-step ragged path.
    for batch in (512, 10):
        x = jax.random.normal(jax.random.fold_in(k_x, batch),
                              (batch, input_size), jnp.float32)
        ref = _reference(x, *raw)

        out = jax.block_until_ready(macro_agent_forward(x, params_f32))
        assert out.shape == (batch, output_size)
        assert jnp.allclose(out, ref, atol=2e-3, rtol=2e-3), (
            f"f32 max abs err {float(jnp.max(jnp.abs(out - ref)))}")

        out = jax.block_until_ready(macro_agent_forward(x, params_bf16))
        assert out.shape == (batch, output_size)
        assert jnp.allclose(out, ref, atol=5e-2, rtol=5e-2), (
            f"bf16 max abs err {float(jnp.max(jnp.abs(out - ref)))}")

    print("KERNEL_OK")
</pallas_src>

<mosaic_0001>
module attributes {stable_mosaic.version = 11 : i64} {
  func.func @_macro_agent_kernel(%arg0: i32, %arg1: memref<128x32xf32, #tpu.memory_space<vmem>>, %arg2: memref<32x128xf32, #tpu.memory_space<vmem>>, %arg3: memref<128x128xf32, #tpu.memory_space<vmem>>, %arg4: memref<8x128xf32, #tpu.memory_space<vmem>>, %arg5: memref<2x128xf32, #tpu.memory_space<vmem>>, %arg6: memref<8x1xf32, #tpu.memory_space<vmem>>, %arg7: memref<8x128xf32, #tpu.memory_space<vmem>>) attributes {dimension_semantics = [#tpu.dimension_semantics<parallel>], iteration_bounds = array<i64: 4>, scalar_prefetch = 0 : i64, scratch_operands = 0 : i64, tpu.core_type = #tpu.core_type<tc>, window_params = [{transform_indices = @transform_0, window_bounds = array<i64: 128, 32>}, {pipeline_mode = #tpu.pipeline_mode<synchronous>, transform_indices = @transform_1, window_bounds = array<i64: 32, 128>}, {pipeline_mode = #tpu.pipeline_mode<synchronous>, transform_indices = @transform_2, window_bounds = array<i64: 128, 128>}, {pipeline_mode = #tpu.pipeline_mode<synchronous>, transform_indices = @transform_3, window_bounds = array<i64: 8, 128>}, {pipeline_mode = #tpu.pipeline_mode<synchronous>, transform_indices = @transform_4, window_bounds = array<i64: 2, 128>}, {pipeline_mode = #tpu.pipeline_mode<synchronous>, transform_indices = @transform_5, window_bounds = array<i64: 8, 1>}, {transform_indices = @transform_6, window_bounds = array<i64: 8, 128>}]} {
    %c0 = arith.constant 0 : index
    %c0_0 = arith.constant 0 : index
    %0 = vector.load %arg1[%c0, %c0_0] : memref<128x32xf32, #tpu.memory_space<vmem>>, vector<128x32xf32>
    %c0_1 = arith.constant 0 : index
    %c0_2 = arith.constant 0 : index
    %1 = vector.load %arg5[%c0_1, %c0_2] : memref<2x128xf32, #tpu.memory_space<vmem>>, vector<1x128xf32>
    %c1 = arith.constant 1 : index
    %c0_3 = arith.constant 0 : index
    %2 = vector.load %arg5[%c1, %c0_3] : memref<2x128xf32, #tpu.memory_space<vmem>>, vector<1x128xf32>
    %c0_4 = arith.constant 0 : index
    %c0_5 = arith.constant 0 : index
    %3 = vector.load %arg2[%c0_4, %c0_5] : memref<32x128xf32, #tpu.memory_space<vmem>>, vector<32x128xf32>
    %cst = arith.constant dense<0.000000e+00> : vector<128x128xf32>
    %4 = tpu.matmul %0, %3, %cst {dimension_numbers = #tpu.dot_dimension_numbers<[1], [0], [0], [1], [0, 0, 1, 1], [], []>} : vector<128x32xf32>, vector<32x128xf32>, vector<128x128xf32> -> vector<128x128xf32>
    %5 = vector.broadcast %1 : vector<1x128xf32> to vector<128x128xf32>
    %6 = arith.addf %4, %5 : vector<128x128xf32>
    %cst_6 = arith.constant 0.000000e+00 : f32
    %7 = vector.broadcast %cst_6 : f32 to vector<128x128xf32>
    %8 = arith.maximumf %6, %7 : vector<128x128xf32>
    %c0_7 = arith.constant 0 : index
    %c0_8 = arith.constant 0 : index
    %9 = vector.load %arg3[%c0_7, %c0_8] : memref<128x128xf32, #tpu.memory_space<vmem>>, vector<128x128xf32>
    %cst_9 = arith.constant dense<0.000000e+00> : vector<128x128xf32>
    %10 = tpu.matmul %8, %9, %cst_9 {dimension_numbers = #tpu.dot_dimension_numbers<[1], [0], [0], [1], [0, 0, 1, 1], [], []>} : vector<128x128xf32>, vector<128x128xf32>, vector<128x128xf32> -> vector<128x128xf32>
    %11 = vector.broadcast %2 : vector<1x128xf32> to vector<128x128xf32>
    %12 = arith.addf %10, %11 : vector<128x128xf32>
    %cst_10 = arith.constant 0.000000e+00 : f32
    %13 = vector.broadcast %cst_10 : f32 to vector<128x128xf32>
    %14 = arith.maximumf %12, %13 : vector<128x128xf32>
    %c0_11 = arith.constant 0 : index
    %c0_12 = arith.constant 0 : index
    %15 = vector.load %arg4[%c0_11, %c0_12] : memref<8x128xf32, #tpu.memory_space<vmem>>, vector<8x128xf32>
    %cst_13 = arith.constant dense<0.000000e+00> : vector<8x128xf32>
    %16 = tpu.matmul %15, %14, %cst_13 {dimension_numbers = #tpu.dot_dimension_numbers<[1], [1], [0], [0], [0, 0, 1, 0], [], []>} : vector<8x128xf32>, vector<128x128xf32>, vector<8x128xf32> -> vector<8x128xf32>
    %c0_14 = arith.constant 0 : index
    %c0_15 = arith.constant 0 : index
    %17 = vector.load %arg6[%c0_14, %c0_15] : memref<8x1xf32, #tpu.memory_space<vmem>>, vector<8x1xf32>
    %18 = vector.broadcast %17 : vector<8x1xf32> to vector<8x128xf32>
    %19 = arith.addf %16, %18 : vector<8x128xf32>
    %c0_16 = arith.constant 0 : index
    %c0_17 = arith.constant 0 : index
    %20 = vector.load %arg7[%c0_16, %c0_17] : memref<8x128xf32, #tpu.memory_space<vmem>>, vector<8x128xf32>
    tpu.vector_store %arg7[%c0_16, %c0_17], %19 {strides = array<i32>} : memref<8x128xf32, #tpu.memory_space<vmem>>, vector<8x128xf32>,
    return
  }
  func.func @transform_0(%arg0: i32) -> (i32, i32) {
    %c0_i32 = arith.constant 0 : i32
    %c0_i32_0 = arith.constant 0 : i32
    return %arg0, %c0_i32 : i32, i32
  }
  func.func @transform_1(%arg0: i32) -> (i32, i32) {
    %c0_i32 = arith.constant 0 : i32
    %c0_i32_0 = arith.constant 0 : i32
    %c0_i32_1 = arith.constant 0 : i32
    return %c0_i32, %c0_i32_0 : i32, i32
  }
  func.func @transform_2(%arg0: i32) -> (i32, i32) {
    %c0_i32 = arith.constant 0 : i32
    %c0_i32_0 = arith.constant 0 : i32
    %c0_i32_1 = arith.constant 0 : i32
    return %c0_i32, %c0_i32_0 : i32, i32
  }
  func.func @transform_3(%arg0: i32) -> (i32, i32) {
    %c0_i32 = arith.constant 0 : i32
    %c0_i32_0 = arith.constant 0 : i32
    %c0_i32_1 = arith.constant 0 : i32
    return %c0_i32, %c0_i32_0 : i32, i32
  }
  func.func @transform_4(%arg0: i32) -> (i32, i32) {
    %c0_i32 = arith.constant 0 : i32
    %c0_i32_0 = arith.constant 0 : i32
    %c0_i32_1 = arith.constant 0 : i32
    return %c0_i32, %c0_i32_0 : i32, i32
  }
  func.func @transform_5(%arg0: i32) -> (i32, i32) {
    %c0_i32 = arith.constant 0 : i32
    %c0_i32_0 = arith.constant 0 : i32
    %c0_i32_1 = arith.constant 0 : i32
    return %c0_i32, %c0_i32_0 : i32, i32
  }
  func.func @transform_6(%arg0: i32) -> (i32, i32) {
    %c0_i32 = arith.constant 0 : i32
    %c0_i32_0 = arith.constant 0 : i32
    return %c0_i32, %arg0 : i32, i32
  }
}

</mosaic_0001>

<llo_original>
// kernel: tpu_custom_call.1
$region0: #{tpu_custom_call.1}
  #allocation0 [shape = 'u32[]', space=smem, size = 0x4, offset = 0x4, fixed_abs, tag = 'smem constant byte address 0x4 - core index']
  #allocation1 [shape = 'u32[144,128]{1,0:T(1,128)}', space=vmem, size = 0x12000, scoped, tag = 'internal scratch']
  %s0 = inlined_call_operand.vmem [shape: f32[512,32], index: 0, kind: input, shape index: {}]
  %s1 = inlined_call_operand.vmem [shape: f32[32,128], index: 1, kind: input, shape index: {}]
  %s2 = inlined_call_operand.vmem [shape: f32[128,128], index: 2, kind: input, shape index: {}]
  %s3 = inlined_call_operand.vmem [shape: f32[8,128], index: 3, kind: input, shape index: {}]
  %s4 = inlined_call_operand.vmem [shape: f32[2,128], index: 4, kind: input, shape index: {}]
  %s5 = inlined_call_operand.vmem [shape: f32[8,1], index: 5, kind: input, shape index: {}]
  %s6 = inlined_call_operand.hbm [shape: f32[8,512], index: 6, kind: output, shape index: {}]
  %s7 = sld [smem:[#allocation0]]
  $region57: #{tpu_custom_call.1} parent=0
    _
  %s9 = ssub.s32 1, %s7
  %s10 = scalar_select 0, %s9, %s7
  $region1: #{tpu_custom_call.1} parent=0
    #allocation2 [shape = 'u8[8192]{0}', space=vmem, size = 0x2000, scoped, tag = 'output window, operand 0']
    #allocation3 [shape = 's32[2]{0}', space=sflag, size = 0x8, scoped, tag = 'scoped memory for tpu_custom_call.1']
    %11 = vsyncpa [#allocation3], 0
    %s12 = scalar_lea.sflag [#allocation3], 1
    %13 = vsyncpa %s12, 0
    loop: start=0, step=1, limit=6
    $region2: #{tpu_custom_call.1} parent=1 // loop_pre_header
      _
    $region3: #{tpu_custom_call.1} parent=1 // loop_header
      %s15 = sphi 0, %s19
      %p16 = scmp.ge.s32.totalorder %s15, 6
      %s25 = sphi 0, %s27
      %s28 = sphi 0, %s25
      %s29 = sphi 0, %s28
      %s45 = sphi 0, %s29
      %s49 = sphi 0, %s49
      %s51 = sphi 0, %s49
      %s52 = sphi 0, %s51
      %s66 = sphi 0, %s52
      %s70 = sphi 0, %s70
      %s72 = sphi 0, %s70
      %s73 = sphi 0, %s72
      %s87 = sphi 0, %s73
      %s91 = sphi 0, %s91
      %s93 = sphi 0, %s91
      %s94 = sphi 0, %s93
      %s108 = sphi 0, %s94
      %s112 = sphi 0, %s112
      %s114 = sphi 0, %s112
      %s115 = sphi 0, %s114
      %s129 = sphi 0, %s115
      %s133 = sphi 0, %s133
      %s135 = sphi 0, %s133
      %s136 = sphi 0, %s135
      %s150 = sphi 0, %s136
      %s156 = sphi 0, %s158
      %s159 = sphi 0, %s156
      %s160 = sphi 0, %s159
      %s176 = sphi 0, %s160
    $region4: #{tpu_custom_call.1} parent=1 // loop_header_branch
      %18 = sbr.rel (%p16) target = $region8
    $region5: #{tpu_custom_call.1} parent=1 // loop_body
      %s20 = ssub.s32 %s15, 1
      %s21 = ssub.s32 %s15, 2
      %s22 = sadd.s32 %s15, 1
      %s23 = ssub.s32 %s15, %s22
      %p24 = scmp.eq.s32.totalorder %s23, 0
      %s26 = sadd.s32 %s25, 1
      %s27 = scalar_select %p24, %s25, %s26
      %p30 = pneg %p24
      %p31 = scmp.eq.s32.totalorder %s15, 3
      %p32 = por %p30, %p31
      %p33 = scmp.ne.s32.totalorder %s25, %s28
      %p34 = scmp.eq.s32.totalorder %s15, 0
      %p35 = por %p33, %p34
      %p36 = scmp.ne.s32.totalorder %s25, %s28
      %p37 = scmp.eq.s32.totalorder %s20, 3
      %p38 = por %p36, %p37
      %p39 = scmp.ne.s32.totalorder %s28, %s29
      %p40 = scmp.eq.s32.totalorder %s20, 0
      %p41 = por %p39, %p40
      %p42 = scmp.ne.s32.totalorder %s28, %s29
      %p43 = scmp.eq.s32.totalorder %s21, 3
      %p44 = por %p42, %p43
      %p46 = scmp.ne.s32.totalorder %s29, %s45
      %p47 = scmp.eq.s32.totalorder %s21, 0
      %p48 = por %p46, %p47
      %s50 = sadd.s32 %s49, 1
      %p53 = scmp.eq.s32.totalorder %s15, 3
      %p54 = scmp.ne.s32.totalorder %s49, %s51
      %p55 = scmp.eq.s32.totalorder %s15, 0
      %p56 = por %p54, %p55
      %p57 = scmp.ne.s32.totalorder %s49, %s51
      %p58 = scmp.eq.s32.totalorder %s20, 3
      %p59 = por %p57, %p58
      %p60 = scmp.ne.s32.totalorder %s51, %s52
      %p61 = scmp.eq.s32.totalorder %s20, 0
      %p62 = por %p60, %p61
      %p63 = scmp.ne.s32.totalorder %s51, %s52
      %p64 = scmp.eq.s32.totalorder %s21, 3
      %p65 = por %p63, %p64
      %p67 = scmp.ne.s32.totalorder %s52, %s66
      %p68 = scmp.eq.s32.totalorder %s21, 0
      %p69 = por %p67, %p68
      %s71 = sadd.s32 %s70, 1
      %p74 = scmp.eq.s32.totalorder %s15, 3
      %p75 = scmp.ne.s32.totalorder %s70, %s72
      %p76 = scmp.eq.s32.totalorder %s15, 0
      %p77 = por %p75, %p76
      %p78 = scmp.ne.s32.totalorder %s70, %s72
      %p79 = scmp.eq.s32.totalorder %s20, 3
      %p80 = por %p78, %p79
      %p81 = scmp.ne.s32.totalorder %s72, %s73
      %p82 = scmp.eq.s32.totalorder %s20, 0
      %p83 = por %p81, %p82
      %p84 = scmp.ne.s32.totalorder %s72, %s73
      %p85 = scmp.eq.s32.totalorder %s21, 3
      %p86 = por %p84, %p85
      %p88 = scmp.ne.s32.totalorder %s73, %s87
      %p89 = scmp.eq.s32.totalorder %s21, 0
      %p90 = por %p88, %p89
      %s92 = sadd.s32 %s91, 1
      %p95 = scmp.eq.s32.totalorder %s15, 3
      %p96 = scmp.ne.s32.totalorder %s91, %s93
      %p97 = scmp.eq.s32.totalorder %s15, 0
      %p98 = por %p96, %p97
      %p99 = scmp.ne.s32.totalorder %s91, %s93
      %p100 = scmp.eq.s32.totalorder %s20, 3
      %p101 = por %p99, %p100
      %p102 = scmp.ne.s32.totalorder %s93, %s94
      %p103 = scmp.eq.s32.totalorder %s20, 0
      %p104 = por %p102, %p103
      %p105 = scmp.ne.s32.totalorder %s93, %s94
      %p106 = scmp.eq.s32.totalorder %s21, 3
      %p107 = por %p105, %p106
      %p109 = scmp.ne.s32.totalorder %s94, %s108
      %p110 = scmp.eq.s32.totalorder %s21, 0
      %p111 = por %p109, %p110
      %s113 = sadd.s32 %s112, 1
      %p116 = scmp.eq.s32.totalorder %s15, 3
      %p117 = scmp.ne.s32.totalorder %s112, %s114
      %p118 = scmp.eq.s32.totalorder %s15, 0
      %p119 = por %p117, %p118
      %p120 = scmp.ne.s32.totalorder %s112, %s114
      %p121 = scmp.eq.s32.totalorder %s20, 3
      %p122 = por %p120, %p121
      %p123 = scmp.ne.s32.totalorder %s114, %s115
      %p124 = scmp.eq.s32.totalorder %s20, 0
      %p125 = por %p123, %p124
      %p126 = scmp.ne.s32.totalorder %s114, %s115
      %p127 = scmp.eq.s32.totalorder %s21, 3
      %p128 = por %p126, %p127
      %p130 = scmp.ne.s32.totalorder %s115, %s129
      %p131 = scmp.eq.s32.totalorder %s21, 0
      %p132 = por %p130, %p131
      %s134 = sadd.s32 %s133, 1
      %p137 = scmp.eq.s32.totalorder %s15, 3
      %p138 = scmp.ne.s32.totalorder %s133, %s135
      %p139 = scmp.eq.s32.totalorder %s15, 0
      %p140 = por %p138, %p139
      %p141 = scmp.ne.s32.totalorder %s133, %s135
      %p142 = scmp.eq.s32.totalorder %s20, 3
      %p143 = por %p141, %p142
      %p144 = scmp.ne.s32.totalorder %s135, %s136
      %p145 = scmp.eq.s32.totalorder %s20, 0
      %p146 = por %p144, %p145
      %p147 = scmp.ne.s32.totalorder %s135, %s136
      %p148 = scmp.eq.s32.totalorder %s21, 3
      %p149 = por %p147, %p148
      %p151 = scmp.ne.s32.totalorder %s136, %s150
      %p152 = scmp.eq.s32.totalorder %s21, 0
      %p153 = por %p151, %p152
      %s154 = ssub.s32 %s15, %s22
      %p155 = scmp.eq.s32.totalorder %s154, 0
      %s157 = sadd.s32 %s156, 1
      %s158 = scalar_select %p155, %s156, %s157
      %p161 = pneg %p155
      %p162 = scmp.eq.s32.totalorder %s15, 3
      %p163 = por %p161, %p162
      %p164 = scmp.ne.s32.totalorder %s156, %s159
      %p165 = scmp.eq.s32.totalorder %s15, 0
      %p166 = por %p164, %p165
      %p167 = scmp.ne.s32.totalorder %s156, %s159
      %p168 = scmp.eq.s32.totalorder %s20, 3
      %p169 = por %p167, %p168
      %p170 = scmp.ne.s32.totalorder %s159, %s160
      %p171 = scmp.eq.s32.totalorder %s20, 0
      %p172 = por %p170, %p171
      %p173 = scmp.ne.s32.totalorder %s159, %s160
      %p174 = scmp.eq.s32.totalorder %s21, 3
      %p175 = por %p173, %p174
      %p177 = scmp.ne.s32.totalorder %s160, %s176
      %p178 = scmp.eq.s32.totalorder %s21, 0
      %p179 = por %p177, %p178
      %p180 = scmp.le.s32.totalorder 1, %s15
      %p181 = scmp.lt.s32.totalorder %s15, 5
      %p182 = pnand %p180, %p181
      %p183 = pneg %p182
      // Predicated region
      $region9: #{tpu_custom_call.1} parent=5 // pred_check
        _
      $region10: #{tpu_custom_call.1} parent=5 // pred_check_branch
        %185 = sbr.rel (%p182) target = $region12
      $region11: #{tpu_custom_call.1} parent=5 // pred_region
        %s186 = ssub.s32 %s15, 1
        // Predicated region
        $region13: #{tpu_custom_call.1} parent=11 // pred_check
          %p187 = pneg %p62
        $region14: #{tpu_custom_call.1} parent=11 // pred_check_branch
          %189 = sbr.rel (%p187) target = $region16
        $region15: #{tpu_custom_call.1} parent=11 // pred_region
          _
        $region16: #{tpu_custom_call.1} parent=11 // pred_fallthru
          _
        // Predicated region
        $region17: #{tpu_custom_call.1} parent=11 // pred_check
          %p190 = pneg %p83
        $region18: #{tpu_custom_call.1} parent=11 // pred_check_branch
          %192 = sbr.rel (%p190) target = $region20
        $region19: #{tpu_custom_call.1} parent=11 // pred_region
          _
        $region20: #{tpu_custom_call.1} parent=11 // pred_fallthru
          _
        // Predicated region
        $region21: #{tpu_custom_call.1} parent=11 // pred_check
          %p193 = pneg %p104
        $region22: #{tpu_custom_call.1} parent=11 // pred_check_branch
          %195 = sbr.rel (%p193) target = $region24
        $region23: #{tpu_custom_call.1} parent=11 // pred_region
          _
        $region24: #{tpu_custom_call.1} parent=11 // pred_fallthru
          _
        // Predicated region
        $region25: #{tpu_custom_call.1} parent=11 // pred_check
          %p196 = pneg %p125
        $region26: #{tpu_custom_call.1} parent=11 // pred_check_branch
          %198 = sbr.rel (%p196) target = $region28
        $region27: #{tpu_custom_call.1} parent=11 // pred_region
          _
        $region28: #{tpu_custom_call.1} parent=11 // pred_fallthru
          _
        // Predicated region
        $region29: #{tpu_custom_call.1} parent=11 // pred_check
          %p199 = pneg %p146
        $region30: #{tpu_custom_call.1} parent=11 // pred_check_branch
          %201 = sbr.rel (%p199) target = $region32
        $region31: #{tpu_custom_call.1} parent=11 // pred_region
          _
        $region32: #{tpu_custom_call.1} parent=11 // pred_fallthru
          _
      $region12: #{tpu_custom_call.1} parent=5 // pred_fallthru
        _
      %p202 = scmp.lt.s32.totalorder %s15, 4
      // Predicated region
      $region33: #{tpu_custom_call.1} parent=5 // pred_check
        %p203 = pneg %p202
      $region34: #{tpu_custom_call.1} parent=5 // pred_check_branch
        %205 = sbr.rel (%p203) target = $region36
      $region35: #{tpu_custom_call.1} parent=5 // pred_region
        // Predicated region
        $region37: #{tpu_custom_call.1} parent=35 // pred_check
          %p206 = pneg %p35
        $region38: #{tpu_custom_call.1} parent=35 // pred_check_branch
          %208 = sbr.rel (%p206) target = $region40
        $region39: #{tpu_custom_call.1} parent=35 // pred_region
          %s209 = smul.u32 16, %s15
          %p210 = scmp.lt.s32.totalorder %s209, 63
          %s211 = scalar_select %p210, %s209, 63
          %s212 = smul.addr %s211, 8
          %s213 = scalar_lea.vmem %s0, %s212
          %s214 = smul.u32 16, %s15
        $region40: #{tpu_custom_call.1} parent=35 // pred_fallthru
          _
      $region36: #{tpu_custom_call.1} parent=5 // pred_fallthru
        _
      %p215 = scmp.le.s32.totalorder 1, %s15
      %p216 = scmp.lt.s32.totalorder %s15, 5
      %p217 = pnand %p215, %p216
      %p218 = pneg %p217
      // Predicated region
      $region41: #{tpu_custom_call.1} parent=5 // pred_check
        _
      $region42: #{tpu_custom_call.1} parent=5 // pred_check_branch
        %220 = sbr.rel (%p217) target = $region44
      $region43: #{tpu_custom_call.1} parent=5 // pred_region
        %s221 = ssub.s32 %s15, 1
        %s222 = smul.u32 16, %s20
        %p223 = scmp.lt.s32.totalorder %s222, 63
        %s224 = scalar_select %p223, %s222, 63
        %s225 = smul.addr %s224, 8
        %s226 = scalar_lea.vmem %s0, %s225
        %p227 = pneg %p41
        %p228 = pneg %p38
        %p229 = pneg %p62
        %p230 = pneg %p59
        %p231 = pneg %p83
        %p232 = pneg %p80
        %p233 = pneg %p104
        %p234 = pneg %p101
        %p235 = pneg %p125
        %p236 = pneg %p122
        %p237 = pneg %p146
        %p238 = pneg %p143
        %p239 = pneg %p172
        %p240 = pneg %p169
        %s241 = sand.u32 %s159, 1
        %s242 = scalar_lea.sflag [#allocation3], %s241
        %s243 = sand.u32 %s159, 1
        %s244 = smul.addr %s243, 8
        %s245 = scalar_lea.vmem [#allocation2], %s244
        %s246 = smul.u32 16, %s20
        %p247 = scmp.lt.s32.totalorder %s246, 63
        %s248 = scalar_select %p247, %s246, 63
        %s249 = smul.addr %s248, 8
        %s250 = scalar_lea.vmem %s0, %s249
        %s251 = smul.u32 16, %s20
        %v252 = vld [vmem:[%s250] sm:$0xff]
        %v253 = vld [vmem:[%s250 + $0x8] sm:$0xff]
        %v254 = vld [vmem:[%s250 + $0x10] sm:$0xff]
        %v255 = vld [vmem:[%s250 + $0x18] sm:$0xff]
        %v256 = vld [vmem:[%s250 + $0x20] sm:$0xff]
        %v257 = vld [vmem:[%s250 + $0x28] sm:$0xff]
        %v258 = vld [vmem:[%s250 + $0x30] sm:$0xff]
        %v259 = vld [vmem:[%s250 + $0x38] sm:$0xff]
        %v260 = vld [vmem:[%s250 + $0x40] sm:$0xff]
        %v261 = vld [vmem:[%s250 + $0x48] sm:$0xff]
        %v262 = vld [vmem:[%s250 + $0x50] sm:$0xff]
        %v263 = vld [vmem:[%s250 + $0x58] sm:$0xff]
        %v264 = vld [vmem:[%s250 + $0x60] sm:$0xff]
        %v265 = vld [vmem:[%s250 + $0x68] sm:$0xff]
        %v266 = vld [vmem:[%s250 + $0x70] sm:$0xff]
        %v267 = vld [vmem:[%s250 + $0x78] sm:$0xff]
        %v268 = vld [vmem:[%s4] sm:$0x1]
        %v269 = vld [vmem:[%s4 + $0x1] sm:$0x1]
        %v270 = vld [vmem:[%s1] sm:$0xff]
        %v271 = vld [vmem:[%s1 + $0x8] sm:$0xff]
        %v272 = vld [vmem:[%s1 + $0x10] sm:$0xff]
        %v273 = vld [vmem:[%s1 + $0x18] sm:$0xff]
        %v274 = vlaneseq
        %v275 = vshrl.u32 %v274, 7
        %v276 = vsub.s32 0, %v275
        %v277 = vrot.slane %v268, %v276
        %vm278 = vcmask 261120
        %v280 = vsel %vm278, %v252, 0
        %v283 = vsel %vm278, %v253, 0
        %v286 = vsel %vm278, %v254, 0
        %v289 = vsel %vm278, %v255, 0
        %v292 = vsel %vm278, %v256, 0
        %v295 = vsel %vm278, %v257, 0
        %v298 = vsel %vm278, %v258, 0
        %v301 = vsel %vm278, %v259, 0
        %v304 = vsel %vm278, %v260, 0
        %v307 = vsel %vm278, %v261, 0
        %v310 = vsel %vm278, %v262, 0
        %v313 = vsel %vm278, %v263, 0
        %v316 = vsel %vm278, %v264, 0
        %v319 = vsel %vm278, %v265, 0
        %v322 = vsel %vm278, %v266, 0
        %v325 = vsel %vm278, %v267, 0
        %327 = vmatprep.subr.mxu0 0.0
        %328 = vmatpush1.msra.mxu0 0.0
        %329 = vmatprep.subr.mxu0 0.0
        %330 = vmatpush1.msra.mxu0 0.0
        %331 = vmatprep.subr.mxu0 0.0
        %332 = vmatpush1.msra.mxu0 0.0
        %333 = vmatprep.subr.mxu0 0.0
        %334 = vmatpush1.msra.mxu0 0.0
        %335 = vmatprep.subr.mxu0 0.0
        %336 = vmatpush1.msra.mxu0 0.0
        %337 = vmatprep.subr.mxu0 0.0
        %338 = vmatpush1.msra.mxu0 0.0
        %339 = vmatprep.subr.mxu0 0.0
        %340 = vmatpush1.msra.mxu0 0.0
        %341 = vmatprep.subr.mxu0 0.0
        %342 = vmatpush1.msra.mxu0 0.0
        %343 = vmatprep.subr.mxu0 0.0
        %344 = vmatpush1.msra.mxu0 0.0
        %345 = vmatprep.subr.mxu0 0.0
        %346 = vmatpush1.msra.mxu0 0.0
        %347 = vmatprep.subr.mxu0 0.0
        %348 = vmatpush1.msra.mxu0 0.0
        %349 = vmatprep.subr.mxu0 0.0
        %350 = vmatpush1.msra.mxu0 0.0
        %351 = vmatprep.subr.mxu0 0.0
        %352 = vmatpush1.msra.mxu0 %v273
        %353 = vmatprep.subr.mxu0 0.0
        %354 = vmatpush1.msra.mxu0 %v272
        %355 = vmatprep.subr.mxu0 0.0
        %356 = vmatpush1.msra.mxu0 %v271
        %357 = vmatprep.subr.mxu0 0.0
        %358 = vmatpush1.msra.mxu0 %v270
        %359 = vmatprep.subr.mxu0 0.0
        %360 = vmatpush2.msra.mxu0 0.0
        %361 = vmatprep.subr.mxu0 0.0
        %362 = vmatpush2.msra.mxu0 0.0
        %363 = vmatprep.subr.mxu0 0.0
        %364 = vmatpush2.msra.mxu0 0.0
        %365 = vmatprep.subr.mxu0 0.0
        %366 = vmatpush2.msra.mxu0 0.0
        %367 = vmatprep.subr.mxu0 0.0
        %368 = vmatpush2.msra.mxu0 0.0
        %369 = vmatprep.subr.mxu0 0.0
        %370 = vmatpush2.msra.mxu0 0.0
        %371 = vmatprep.subr.mxu0 0.0
        %372 = vmatpush2.msra.mxu0 0.0
        %373 = vmatprep.subr.mxu0 0.0
        %374 = vmatpush2.msra.mxu0 0.0
        %375 = vmatprep.subr.mxu0 0.0
        %376 = vmatpush2.msra.mxu0 0.0
        %377 = vmatprep.subr.mxu0 0.0
        %378 = vmatpush2.msra.mxu0 0.0
        %379 = vmatprep.subr.mxu0 0.0
        %380 = vmatpush2.msra.mxu0 0.0
        %381 = vmatprep.subr.mxu0 0.0
        %382 = vmatpush2.msra.mxu0 0.0
        %383 = vmatprep.subr.mxu0 0.0
        %384 = vmatpush2.msra.mxu0 0.0
        %385 = vmatprep.subr.mxu0 0.0
        %386 = vmatpush2.msra.mxu0 0.0
        %387 = vmatprep.subr.mxu0 0.0
        %388 = vmatpush2.msra.mxu0 0.0
        %389 = vmatprep.subr.mxu0 0.0
        %390 = vmatpush2.msra.mxu0 0.0
        %391 = vmatprep.mubr.f32.mxu0 0.0
        %392 = vmatmul.mubr.f32.gmra.mxu0 %v280
        %v393 = vpop.f32.mrf.mxu0
        %v394 = vadd.f32 %v277, %v393
        %v395 = vpop.f32.mrf.mxu0
        %396 = vmatprep.mubr.f32.mxu0 0.0
        %397 = vmatmul.mubr.f32.gmra.mxu0 %v283
        %v398 = vpop.f32.mrf.mxu0
        %v399 = vadd.f32 %v277, %v398
        %v400 = vpop.f32.mrf.mxu0
        %401 = vmatprep.mubr.f32.mxu0 0.0
        %402 = vmatmul.mubr.f32.gmra.mxu0 %v286
        %v403 = vpop.f32.mrf.mxu0
        %v404 = vadd.f32 %v277, %v403
        %v405 = vpop.f32.mrf.mxu0
        %406 = vmatprep.mubr.f32.mxu0 0.0
        %407 = vmatmul.mubr.f32.gmra.mxu0 %v289
        %v408 = vpop.f32.mrf.mxu0
        %v409 = vadd.f32 %v277, %v408
        %v410 = vpop.f32.mrf.mxu0
        %411 = vmatprep.mubr.f32.mxu0 0.0
        %412 = vmatmul.mubr.f32.gmra.mxu0 %v292
        %v413 = vpop.f32.mrf.mxu0
        %v414 = vadd.f32 %v277, %v413
        %v415 = vpop.f32.mrf.mxu0
        %416 = vmatprep.mubr.f32.mxu0 0.0
        %417 = vmatmul.mubr.f32.gmra.mxu0 %v295
        %v418 = vpop.f32.mrf.mxu0
        %v419 = vadd.f32 %v277, %v418
        %v420 = vpop.f32.mrf.mxu0
        %421 = vmatprep.mubr.f32.mxu0 0.0
        %422 = vmatmul.mubr.f32.gmra.mxu0 %v298
        %v423 = vpop.f32.mrf.mxu0
        %v424 = vadd.f32 %v277, %v423
        %v425 = vpop.f32.mrf.mxu0
        %426 = vmatprep.mubr.f32.mxu0 0.0
        %427 = vmatmul.mubr.f32.gmra.mxu0 %v301
        %v428 = vpop.f32.mrf.mxu0
        %v429 = vadd.f32 %v277, %v428
        %v430 = vpop.f32.mrf.mxu0
        %431 = vmatprep.mubr.f32.mxu0 0.0
        %432 = vmatmul.mubr.f32.gmra.mxu0 %v304
        %v433 = vpop.f32.mrf.mxu0
        %v434 = vadd.f32 %v277, %v433
        %v435 = vpop.f32.mrf.mxu0
        %436 = vmatprep.mubr.f32.mxu0 0.0
        %437 = vmatmul.mubr.f32.gmra.mxu0 %v307
        %v438 = vpop.f32.mrf.mxu0
        %v439 = vadd.f32 %v277, %v438
        %v440 = vpop.f32.mrf.mxu0
        %441 = vmatprep.mubr.f32.mxu0 0.0
        %442 = vmatmul.mubr.f32.gmra.mxu0 %v310
        %v443 = vpop.f32.mrf.mxu0
        %v444 = vadd.f32 %v277, %v443
        %v445 = vpop.f32.mrf.mxu0
        %446 = vmatprep.mubr.f32.mxu0 0.0
        %447 = vmatmul.mubr.f32.gmra.mxu0 %v313
        %v448 = vpop.f32.mrf.mxu0
        %v449 = vadd.f32 %v277, %v448
        %v450 = vpop.f32.mrf.mxu0
        %451 = vmatprep.mubr.f32.mxu0 0.0
        %452 = vmatmul.mubr.f32.gmra.mxu0 %v316
        %v453 = vpop.f32.mrf.mxu0
        %v454 = vadd.f32 %v277, %v453
        %v455 = vpop.f32.mrf.mxu0
        %456 = vmatprep.mubr.f32.mxu0 0.0
        %457 = vmatmul.mubr.f32.gmra.mxu0 %v319
        %v458 = vpop.f32.mrf.mxu0
        %v459 = vadd.f32 %v277, %v458
        %v460 = vpop.f32.mrf.mxu0
        %461 = vmatprep.mubr.f32.mxu0 0.0
        %462 = vmatmul.mubr.f32.gmra.mxu0 %v322
        %v463 = vpop.f32.mrf.mxu0
        %v464 = vadd.f32 %v277, %v463
        %v465 = vpop.f32.mrf.mxu0
        %466 = vmatprep.mubr.f32.mxu0 0.0
        %467 = vmatmul.mubr.f32.gmra.mxu0 %v325
        %v468 = vpop.f32.mrf.mxu0
        %v469 = vadd.f32 %v277, %v468
        %v470 = vpop.f32.mrf.mxu0
        %471 = vdwg.mxu0
        %v472 = vmax.f32 %v394, 0.0
        %v473 = vmax.f32 %v399, 0.0
        %v474 = vmax.f32 %v404, 0.0
        %v475 = vmax.f32 %v409, 0.0
        %v476 = vmax.f32 %v414, 0.0
        %v477 = vmax.f32 %v419, 0.0
        %v478 = vmax.f32 %v424, 0.0
        %v479 = vmax.f32 %v429, 0.0
        %v480 = vmax.f32 %v434, 0.0
        %v481 = vmax.f32 %v439, 0.0
        %v482 = vmax.f32 %v444, 0.0
        %v483 = vmax.f32 %v449, 0.0
        %v484 = vmax.f32 %v454, 0.0
        %v485 = vmax.f32 %v459, 0.0
        %v486 = vmax.f32 %v464, 0.0
        %v487 = vmax.f32 %v469, 0.0
        %v488 = vld [vmem:[%s2] sm:$0xff]
        %v489 = vld [vmem:[%s2 + $0x8] sm:$0xff]
        %v490 = vld [vmem:[%s2 + $0x10] sm:$0xff]
        %v491 = vld [vmem:[%s2 + $0x18] sm:$0xff]
        %v492 = vld [vmem:[%s2 + $0x20] sm:$0xff]
        %v493 = vld [vmem:[%s2 + $0x28] sm:$0xff]
        %v494 = vld [vmem:[%s2 + $0x30] sm:$0xff]
        %v495 = vld [vmem:[%s2 + $0x38] sm:$0xff]
        %v496 = vld [vmem:[%s2 + $0x40] sm:$0xff]
        %v497 = vld [vmem:[%s2 + $0x48] sm:$0xff]
        %v498 = vld [vmem:[%s2 + $0x50] sm:$0xff]
        %v499 = vld [vmem:[%s2 + $0x58] sm:$0xff]
        %v500 = vld [vmem:[%s2 + $0x60] sm:$0xff]
        %v501 = vld [vmem:[%s2 + $0x68] sm:$0xff]
        %v502 = vld [vmem:[%s2 + $0x70] sm:$0xff]
        %v503 = vld [vmem:[%s2 + $0x78] sm:$0xff]
        %v504 = vlaneseq
        %v505 = vshrl.u32 %v504, 7
        %v506 = vsub.s32 0, %v505
        %v507 = vrot.slane %v269, %v506
        %508 = vmatprep.subr.mxu0 0.0
        %509 = vmatpush1.msra.mxu0 %v503
        %510 = vmatprep.subr.mxu0 0.0
        %511 = vmatpush1.msra.mxu0 %v502
        %512 = vmatprep.subr.mxu0 0.0
        %513 = vmatpush1.msra.mxu0 %v501
        %514 = vmatprep.subr.mxu0 0.0
        %515 = vmatpush1.msra.mxu0 %v500
        %516 = vmatprep.subr.mxu0 0.0
        %517 = vmatpush1.msra.mxu0 %v499
        %518 = vmatprep.subr.mxu0 0.0
        %519 = vmatpush1.msra.mxu0 %v498
        %520 = vmatprep.subr.mxu0 0.0
        %521 = vmatpush1.msra.mxu0 %v497
        %522 = vmatprep.subr.mxu0 0.0
        %523 = vmatpush1.msra.mxu0 %v496
        %524 = vmatprep.subr.mxu0 0.0
        %525 = vmatpush1.msra.mxu0 %v495
        %526 = vmatprep.subr.mxu0 0.0
        %527 = vmatpush1.msra.mxu0 %v494
        %528 = vmatprep.subr.mxu0 0.0
        %529 = vmatpush1.msra.mxu0 %v493
        %530 = vmatprep.subr.mxu0 0.0
        %531 = vmatpush1.msra.mxu0 %v492
        %532 = vmatprep.subr.mxu0 0.0
        %533 = vmatpush1.msra.mxu0 %v491
        %534 = vmatprep.subr.mxu0 0.0
        %535 = vmatpush1.msra.mxu0 %v490
        %536 = vmatprep.subr.mxu0 0.0
        %537 = vmatpush1.msra.mxu0 %v489
        %538 = vmatprep.subr.mxu0 0.0
        %539 = vmatpush1.msra.mxu0 %v488
        %540 = vmatprep.subr.mxu0 0.0
        %541 = vmatpush2.msra.mxu0 0.0
        %542 = vmatprep.subr.mxu0 0.0
        %543 = vmatpush2.msra.mxu0 0.0
        %544 = vmatprep.subr.mxu0 0.0
        %545 = vmatpush2.msra.mxu0 0.0
        %546 = vmatprep.subr.mxu0 0.0
        %547 = vmatpush2.msra.mxu0 0.0
        %548 = vmatprep.subr.mxu0 0.0
        %549 = vmatpush2.msra.mxu0 0.0
        %550 = vmatprep.subr.mxu0 0.0
        %551 = vmatpush2.msra.mxu0 0.0
        %552 = vmatprep.subr.mxu0 0.0
        %553 = vmatpush2.msra.mxu0 0.0
        %554 = vmatprep.subr.mxu0 0.0
        %555 = vmatpush2.msra.mxu0 0.0
        %556 = vmatprep.subr.mxu0 0.0
        %557 = vmatpush2.msra.mxu0 0.0
        %558 = vmatprep.subr.mxu0 0.0
        %559 = vmatpush2.msra.mxu0 0.0
        %560 = vmatprep.subr.mxu0 0.0
        %561 = vmatpush2.msra.mxu0 0.0
        %562 = vmatprep.subr.mxu0 0.0
        %563 = vmatpush2.msra.mxu0 0.0
        %564 = vmatprep.subr.mxu0 0.0
        %565 = vmatpush2.msra.mxu0 0.0
        %566 = vmatprep.subr.mxu0 0.0
        %567 = vmatpush2.msra.mxu0 0.0
        %568 = vmatprep.subr.mxu0 0.0
        %569 = vmatpush2.msra.mxu0 0.0
        %570 = vmatprep.subr.mxu0 0.0
        %571 = vmatpush2.msra.mxu0 0.0
        %572 = vmatprep.mubr.f32.mxu0 0.0
        %573 = vmatmul.mubr.f32.gmra.mxu0 %v472
        %v574 = vpop.f32.mrf.mxu0
        %v575 = vadd.f32 %v507, %v574
        %v576 = vpop.f32.mrf.mxu0
        %577 = vmatprep.mubr.f32.mxu0 0.0
        %578 = vmatmul.mubr.f32.gmra.mxu0 %v473
        %v579 = vpop.f32.mrf.mxu0
        %v580 = vadd.f32 %v507, %v579
        %v581 = vpop.f32.mrf.mxu0
        %582 = vmatprep.mubr.f32.mxu0 0.0
        %583 = vmatmul.mubr.f32.gmra.mxu0 %v474
        %v584 = vpop.f32.mrf.mxu0
        %v585 = vadd.f32 %v507, %v584
        %v586 = vpop.f32.mrf.mxu0
        %587 = vmatprep.mubr.f32.mxu0 0.0
        %588 = vmatmul.mubr.f32.gmra.mxu0 %v475
        %v589 = vpop.f32.mrf.mxu0
        %v590 = vadd.f32 %v507, %v589
        %v591 = vpop.f32.mrf.mxu0
        %592 = vmatprep.mubr.f32.mxu0 0.0
        %593 = vmatmul.mubr.f32.gmra.mxu0 %v476
        %v594 = vpop.f32.mrf.mxu0
        %v595 = vadd.f32 %v507, %v594
        %v596 = vpop.f32.mrf.mxu0
        %597 = vmatprep.mubr.f32.mxu0 0.0
        %598 = vmatmul.mubr.f32.gmra.mxu0 %v477
        %v599 = vpop.f32.mrf.mxu0
        %v600 = vadd.f32 %v507, %v599
        %v601 = vpop.f32.mrf.mxu0
        %602 = vmatprep.mubr.f32.mxu0 0.0
        %603 = vmatmul.mubr.f32.gmra.mxu0 %v478
        %v604 = vpop.f32.mrf.mxu0
        %v605 = vadd.f32 %v507, %v604
        %v606 = vpop.f32.mrf.mxu0
        %607 = vmatprep.mubr.f32.mxu0 0.0
        %608 = vmatmul.mubr.f32.gmra.mxu0 %v479
        %v609 = vpop.f32.mrf.mxu0
        %v610 = vadd.f32 %v507, %v609
        %v611 = vpop.f32.mrf.mxu0
        %612 = vmatprep.mubr.f32.mxu0 0.0
        %613 = vmatmul.mubr.f32.gmra.mxu0 %v480
        %v614 = vpop.f32.mrf.mxu0
        %v615 = vadd.f32 %v507, %v614
        %v616 = vpop.f32.mrf.mxu0
        %617 = vmatprep.mubr.f32.mxu0 0.0
        %618 = vmatmul.mubr.f32.gmra.mxu0 %v481
        %v619 = vpop.f32.mrf.mxu0
        %v620 = vadd.f32 %v507, %v619
        %v621 = vpop.f32.mrf.mxu0
        %622 = vmatprep.mubr.f32.mxu0 0.0
        %623 = vmatmul.mubr.f32.gmra.mxu0 %v482
        %v624 = vpop.f32.mrf.mxu0
        %v625 = vadd.f32 %v507, %v624
        %v626 = vpop.f32.mrf.mxu0
        %627 = vmatprep.mubr.f32.mxu0 0.0
        %628 = vmatmul.mubr.f32.gmra.mxu0 %v483
        %v629 = vpop.f32.mrf.mxu0
        %v630 = vadd.f32 %v507, %v629
        %v631 = vpop.f32.mrf.mxu0
        %632 = vmatprep.mubr.f32.mxu0 0.0
        %633 = vmatmul.mubr.f32.gmra.mxu0 %v484
        %v634 = vpop.f32.mrf.mxu0
        %v635 = vadd.f32 %v507, %v634
        %v636 = vpop.f32.mrf.mxu0
        %637 = vmatprep.mubr.f32.mxu0 0.0
        %638 = vmatmul.mubr.f32.gmra.mxu0 %v485
        %v639 = vpop.f32.mrf.mxu0
        %v640 = vadd.f32 %v507, %v639
        %v641 = vpop.f32.mrf.mxu0
        %642 = vmatprep.mubr.f32.mxu0 0.0
        %643 = vmatmul.mubr.f32.gmra.mxu0 %v486
        %v644 = vpop.f32.mrf.mxu0
        %v645 = vadd.f32 %v507, %v644
        %v646 = vpop.f32.mrf.mxu0
        %647 = vmatprep.mubr.f32.mxu0 0.0
        %648 = vmatmul.mubr.f32.gmra.mxu0 %v487
        %v649 = vpop.f32.mrf.mxu0
        %v650 = vadd.f32 %v507, %v649
        %v651 = vpop.f32.mrf.mxu0
        %652 = vdwg.mxu0
        %v653 = vmax.f32 %v575, 0.0
        %v654 = vmax.f32 %v580, 0.0
        %v655 = vmax.f32 %v585, 0.0
        %v656 = vmax.f32 %v590, 0.0
        %v657 = vmax.f32 %v595, 0.0
        %v658 = vmax.f32 %v600, 0.0
        %v659 = vmax.f32 %v605, 0.0
        %v660 = vmax.f32 %v610, 0.0
        %v661 = vmax.f32 %v615, 0.0
        %v662 = vmax.f32 %v620, 0.0
        %v663 = vmax.f32 %v625, 0.0
        %v664 = vmax.f32 %v630, 0.0
        %v665 = vmax.f32 %v635, 0.0
        %v666 = vmax.f32 %v640, 0.0
        %v667 = vmax.f32 %v645, 0.0
        %v668 = vmax.f32 %v650, 0.0
        %v669 = vld [vmem:[%s3] sm:$0xff]
        %v670 = vld [vmem:[%s5] sm:$0xff]
        %672 = vset.pattern.permute.xlu0 0
        %673 = vperm.xlu0 %672, %v670
        %v674 = vpop.permute.xlu0 %673
        %676 = vmatprep.subr.mxu0 0.0
        %677 = vmatpush1.xpose.msra.mxu0 %v668
        %678 = vmatprep.subr.mxu0 0.0
        %679 = vmatpush1.xpose.msra.mxu0 %v667
        %680 = vmatprep.subr.mxu0 0.0
        %681 = vmatpush1.xpose.msra.mxu0 %v666
        %682 = vmatprep.subr.mxu0 0.0
        %683 = vmatpush1.xpose.msra.mxu0 %v665
        %684 = vmatprep.subr.mxu0 0.0
        %685 = vmatpush1.xpose.msra.mxu0 %v664
        %686 = vmatprep.subr.mxu0 0.0
        %687 = vmatpush1.xpose.msra.mxu0 %v663
        %688 = vmatprep.subr.mxu0 0.0
        %689 = vmatpush1.xpose.msra.mxu0 %v662
        %690 = vmatprep.subr.mxu0 0.0
        %691 = vmatpush1.xpose.msra.mxu0 %v661
        %692 = vmatprep.subr.mxu0 0.0
        %693 = vmatpush1.xpose.msra.mxu0 %v660
        %694 = vmatprep.subr.mxu0 0.0
        %695 = vmatpush1.xpose.msra.mxu0 %v659
        %696 = vmatprep.subr.mxu0 0.0
        %697 = vmatpush1.xpose.msra.mxu0 %v658
        %698 = vmatprep.subr.mxu0 0.0
        %699 = vmatpush1.xpose.msra.mxu0 %v657
        %700 = vmatprep.subr.mxu0 0.0
        %701 = vmatpush1.xpose.msra.mxu0 %v656
        %702 = vmatprep.subr.mxu0 0.0
        %703 = vmatpush1.xpose.msra.mxu0 %v655
        %704 = vmatprep.subr.mxu0 0.0
        %705 = vmatpush1.xpose.msra.mxu0 %v654
        %706 = vmatprep.subr.mxu0 0.0
        %707 = vmatpush1.xpose.msra.mxu0 %v653
        %708 = vmatprep.subr.mxu0 0.0
        %709 = vmatpush2.xpose.msra.mxu0 0.0
        %710 = vmatprep.subr.mxu0 0.0
        %711 = vmatpush2.xpose.msra.mxu0 0.0
        %712 = vmatprep.subr.mxu0 0.0
        %713 = vmatpush2.xpose.msra.mxu0 0.0
        %714 = vmatprep.subr.mxu0 0.0
        %715 = vmatpush2.xpose.msra.mxu0 0.0
        %716 = vmatprep.subr.mxu0 0.0
        %717 = vmatpush2.xpose.msra.mxu0 0.0
        %718 = vmatprep.subr.mxu0 0.0
        %719 = vmatpush2.xpose.msra.mxu0 0.0
        %720 = vmatprep.subr.mxu0 0.0
        %721 = vmatpush2.xpose.msra.mxu0 0.0
        %722 = vmatprep.subr.mxu0 0.0
        %723 = vmatpush2.xpose.msra.mxu0 0.0
        %724 = vmatprep.subr.mxu0 0.0
        %725 = vmatpush2.xpose.msra.mxu0 0.0
        %726 = vmatprep.subr.mxu0 0.0
        %727 = vmatpush2.xpose.msra.mxu0 0.0
        %728 = vmatprep.subr.mxu0 0.0
        %729 = vmatpush2.xpose.msra.mxu0 0.0
        %730 = vmatprep.subr.mxu0 0.0
        %731 = vmatpush2.xpose.msra.mxu0 0.0
        %732 = vmatprep.subr.mxu0 0.0
        %733 = vmatpush2.xpose.msra.mxu0 0.0
        %734 = vmatprep.subr.mxu0 0.0
        %735 = vmatpush2.xpose.msra.mxu0 0.0
        %736 = vmatprep.subr.mxu0 0.0
        %737 = vmatpush2.xpose.msra.mxu0 0.0
        %738 = vmatprep.subr.mxu0 0.0
        %739 = vmatpush2.xpose.msra.mxu0 0.0
        %740 = vmatprep.mubr.f32.mxu0 0.0
        %741 = vmatmul.mubr.f32.gmra.mxu0 %v669
        %v742 = vpop.f32.mrf.mxu0
        %v743 = vadd.f32 %v674, %v742
        %v744 = vpop.f32.mrf.mxu0
        %745 = vdwg.mxu0
        %746 = vst [vmem:[%s245] sm:$0xff] %v743
        %s747 = sand.u32 %s159, 1
        %s748 = scalar_lea.sflag [#allocation3], %s747
        %s749 = sand.u32 %s159, 1
        %s750 = smul.addr %s749, 8
        %s751 = scalar_lea.vmem [#allocation2], %s750
        // Predicated region
        $region45: #{tpu_custom_call.1} parent=43 // pred_check
          %p752 = pneg %p169
        $region46: #{tpu_custom_call.1} parent=43 // pred_check_branch
          %754 = sbr.rel (%p752) target = $region48
        $region47: #{tpu_custom_call.1} parent=43 // pred_region
          %s756 = ssub.s32 128, 128
          %757 = vsyncadd %s748, %s756
          %s758 = smul.addr %s20, 128
          %s759 = scalar_lea.hbm %s6, %s758
          %s761 = sshll.u32 %s751, 4
          %s762 = int_to_ptr.vmem [resolvable:$true] %s761
          %764 = dma.vmem_to_hbm [thread:$0]  %s762, 128, %s759, %s748
        $region48: #{tpu_custom_call.1} parent=43 // pred_fallthru
          _
      $region44: #{tpu_custom_call.1} parent=5 // pred_fallthru
        _
      %p765 = scmp.le.s32.totalorder 2, %s15
      // Predicated region
      $region49: #{tpu_custom_call.1} parent=5 // pred_check
        %p766 = pneg %p765
      $region50: #{tpu_custom_call.1} parent=5 // pred_check_branch
        %768 = sbr.rel (%p766) target = $region52
      $region51: #{tpu_custom_call.1} parent=5 // pred_region
        %s769 = ssub.s32 %s15, 2
        // Predicated region
        $region53: #{tpu_custom_call.1} parent=51 // pred_check
          %p770 = pneg %p175
        $region54: #{tpu_custom_call.1} parent=51 // pred_check_branch
          %772 = sbr.rel (%p770) target = $region56
        $region55: #{tpu_custom_call.1} parent=51 // pred_region
          %s773 = sand.u32 %s160, 1
          %s774 = scalar_lea.sflag [#allocation3], %s773
          %s775 = sand.u32 %s160, 1
          %s776 = smul.addr %s775, 8
          %s777 = scalar_lea.vmem [#allocation2], %s776
          %778 = dma.done %s774, 128
        $region56: #{tpu_custom_call.1} parent=51 // pred_fallthru
          _
      $region52: #{tpu_custom_call.1} parent=5 // pred_fallthru
        _
    $region6: #{tpu_custom_call.1} parent=1 // loop_footer
      %s19 = sadd.s32 1, %s15
    $region7: #{tpu_custom_call.1} parent=1 // loop_footer_branch
      %14 = sbr.rel target = $region3
    $region8: #{tpu_custom_call.1} parent=1 // loop_exit
      _
    %779 = vsyncpa [#allocation3], 1
    %s780 = scalar_lea.sflag [#allocation3], 1
    %781 = vsyncpa %s780, 1

</llo_original>
